<compile_context>
chip_gen: v7x
topology: tpu7x:2x2x1
jax: 0.10.0
libtpu: 0.0.40
codegen_flags: <defaults>
</compile_context>

<pallas_src>
import functools

import jax
import jax.numpy as jnp
from jax.experimental import pallas as pl
from jax.experimental.pallas import tpu as pltpu


# ----------------------------------------------------------------------------
# Kernels
# ----------------------------------------------------------------------------
def _pool_excite_kernel(x_ref, w1_ref, w2_ref, s_ref, acc_ref, *, inv_hw):
    """Pass 1: global-average-pool over HW tiles, then the tiny excitation MLP.

    x_ref : (1, C, hwt)   input tile (any float dtype)
    w1_ref: (Cr, C)       fc1 weight, PyTorch (out, in) layout
    w2_ref: (C, Cr)       fc2 weight, PyTorch (out, in) layout
    s_ref : (1, C, 1)     f32 per-channel gate (written at the last HW step)
    acc_ref:(1, C, 1)     f32 pool accumulator (scratch, persists over HW axis)
    """
    hw_i = pl.program_id(1)

    @pl.when(hw_i == 0)
    def _():
        acc_ref[...] = jnp.zeros_like(acc_ref)

    # Partial sum over the spatial (lane) axis, accumulated in f32.
    acc_ref[...] += jnp.sum(x_ref[...].astype(jnp.float32), axis=-1,
                            keepdims=True)

    @pl.when(hw_i == pl.num_programs(1) - 1)
    def _():
        pooled = acc_ref[0] * inv_hw                                   # (C, 1)
        h = jnp.dot(w1_ref[...], pooled,
                    preferred_element_type=jnp.float32)                # (Cr, 1)
        h = jnp.maximum(h, 0.0)
        g = jnp.dot(w2_ref[...], h,
                    preferred_element_type=jnp.float32)                # (C, 1)
        s_ref[...] = jax.nn.sigmoid(g)[None]                           # (1, C, 1)


def _scale_kernel(x_ref, s_ref, o_ref):
    """Pass 2: o = x * s, per-channel gate lane-broadcast over the HW tile."""
    x = x_ref[...]                                   # (1, C, hwt)
    gate = s_ref[...].astype(x.dtype)                # (1, C, 1)
    o_ref[...] = (x * gate).astype(o_ref.dtype)


# ----------------------------------------------------------------------------
# Tiling policy
# ----------------------------------------------------------------------------
def _pick_hw_tile(hw, c, itemsize, target_bytes=2 * 1024 * 1024):
    """Largest divisor of `hw` whose (C, hwt) slab is ~target_bytes.

    Prefers divisors that are multiples of 128 (lane-dense, unmasked stores).
    Moderate tiles (~2 MiB) hit the HBM roofline while leaving plenty of VMEM
    headroom for double-buffering on every generation (incl. v7x's 64 MiB).
    """
    cap = max(1, target_bytes // max(1, c * itemsize))
    if hw <= cap:
        return hw
    best_any = 1
    for t in range(int(min(cap, hw)), 0, -1):
        if hw % t == 0:
            if t % 128 == 0:
                return t
            best_any = max(best_any, t)
    return best_any


# ----------------------------------------------------------------------------
# Wrapper
# ----------------------------------------------------------------------------
def se_forward(x, w1, w2):
    """Squeeze-and-Excitation forward.

    x : (B, C, H, W)   NCHW activations (f32 or bf16)
    w1: (Cr, C)        fc1 weight, PyTorch nn.Linear (out, in) layout, no bias
    w2: (C, Cr)        fc2 weight, PyTorch nn.Linear (out, in) layout, no bias
    """
    B, C, H, W = x.shape
    Cr = w1.shape[0]
    assert w1.shape == (Cr, C) and w2.shape == (C, Cr)
    HW = H * W
    itemsize = jnp.dtype(x.dtype).itemsize

    x3 = x.reshape(B, C, HW)                 # free reshape — no HBM transpose
    hwt = _pick_hw_tile(HW, C, itemsize)
    n_hw = HW // hwt

    # ---- pass 1: pool + excitation -> per-channel gate (B, C, 1) in f32 ----
    pool_cost = pl.CostEstimate(
        flops=B * C * HW + 4 * B * C * Cr,
        transcendentals=B * C,                                     # sigmoid
        bytes_accessed=B * C * HW * itemsize + 2 * C * Cr * 4 + B * C * 4,
    )
    s = pl.pallas_call(
        functools.partial(_pool_excite_kernel, inv_hw=1.0 / float(HW)),
        out_shape=jax.ShapeDtypeStruct((B, C, 1), jnp.float32),
        grid_spec=pltpu.PrefetchScalarGridSpec(
            num_scalar_prefetch=0,
            grid=(B, n_hw),
            in_specs=[
                pl.BlockSpec((1, C, hwt), lambda b, h: (b, 0, h)),
                pl.BlockSpec((Cr, C), lambda b, h: (0, 0)),
                pl.BlockSpec((C, Cr), lambda b, h: (0, 0)),
            ],
            out_specs=pl.BlockSpec((1, C, 1), lambda b, h: (b, 0, 0)),
            scratch_shapes=[pltpu.VMEM((1, C, 1), jnp.float32)],
        ),
        compiler_params=pltpu.CompilerParams(
            dimension_semantics=("parallel", "arbitrary")),
        cost_estimate=pool_cost,
    )(x3, w1, w2)

    # ---- pass 2: blocked scale o = x * s over (B, HW) tiles ---------------
    scale_cost = pl.CostEstimate(
        flops=B * C * HW,
        transcendentals=0,
        bytes_accessed=2 * B * C * HW * itemsize + B * C * 4,
    )
    out3 = pl.pallas_call(
        _scale_kernel,
        out_shape=jax.ShapeDtypeStruct((B, C, HW), x.dtype),
        grid_spec=pltpu.PrefetchScalarGridSpec(
            num_scalar_prefetch=0,
            grid=(B, n_hw),
            in_specs=[
                pl.BlockSpec((1, C, hwt), lambda b, h: (b, 0, h)),
                pl.BlockSpec((1, C, 1), lambda b, h: (b, 0, 0)),
            ],
            out_specs=pl.BlockSpec((1, C, hwt), lambda b, h: (b, 0, h)),
        ),
        compiler_params=pltpu.CompilerParams(
            dimension_semantics=("parallel", "parallel")),
        cost_estimate=scale_cost,
    )(x3, s)

    return out3.reshape(B, C, H, W)          # free reshape — no HBM transpose


# ----------------------------------------------------------------------------
# Reference & test
# ----------------------------------------------------------------------------
def se_reference(x, w1, w2):
    pooled = jnp.mean(x, axis=(2, 3))                          # (B, C)
    h = jnp.maximum(pooled @ w1.T, 0.0)                        # (B, Cr)
    s = jax.nn.sigmoid(h @ w2.T)                               # (B, C)
    return x * s[:, :, None, None]


if __name__ == "__main__":
    B, C, H, W = 2, 64, 8, 8
    reduction = 16
    Cr = C // reduction

    key = jax.random.PRNGKey(0)
    kx, k1, k2 = jax.random.split(key, 3)
    x = jax.random.normal(kx, (B, C, H, W), dtype=jnp.float32)
    # PyTorch nn.Linear stores weight as (out, in); we consume that layout
    # directly (column-vector excitation), so no weight transposes anywhere.
    w1 = jax.random.normal(k1, (Cr, C), dtype=jnp.float32) * (1.0 / jnp.sqrt(C))
    w2 = jax.random.normal(k2, (C, Cr), dtype=jnp.float32) * (1.0 / jnp.sqrt(Cr))

    out = se_forward(x, w1, w2)
    jax.block_until_ready(out)

    ref = se_reference(x, w1, w2)
    assert out.shape == (B, C, H, W)
    assert jnp.allclose(out, ref, atol=1e-5, rtol=1e-5)

    print("KERNEL_OK")
</pallas_src>

<mosaic_0001>
module attributes {stable_mosaic.version = 11 : i64} {
  func.func @_pool_excite_kernel(%arg0: i32, %arg1: i32, %arg2: memref<1x64x64xf32, #tpu.memory_space<vmem>>, %arg3: memref<4x64xf32, #tpu.memory_space<vmem>>, %arg4: memref<64x4xf32, #tpu.memory_space<vmem>>, %arg5: memref<1x64x1xf32, #tpu.memory_space<vmem>>, %arg6: memref<1x64x1xf32, #tpu.memory_space<vmem>>) attributes {dimension_semantics = [#tpu.dimension_semantics<parallel>, #tpu.dimension_semantics<arbitrary>], iteration_bounds = array<i64: 2, 1>, scalar_prefetch = 0 : i64, scratch_operands = 1 : i64, tpu.core_type = #tpu.core_type<tc>, window_params = [{transform_indices = @transform_0, window_bounds = array<i64: 1, 64, 64>}, {pipeline_mode = #tpu.pipeline_mode<synchronous>, transform_indices = @transform_1, window_bounds = array<i64: 4, 64>}, {pipeline_mode = #tpu.pipeline_mode<synchronous>, transform_indices = @transform_2, window_bounds = array<i64: 64, 4>}, {transform_indices = @transform_3, window_bounds = array<i64: 1, 64, 1>}]} {
    %c0_i32 = arith.constant 0 : i32
    %0 = arith.cmpi eq, %arg1, %c0_i32 : i32
    %1 = arith.extui %0 : i1 to i32
    %c0_i32_0 = arith.constant 0 : i32
    %2 = arith.cmpi ne, %1, %c0_i32_0 : i32
    scf.if %2 {
      %cst_11 = arith.constant 0.000000e+00 : f32
      %12 = vector.broadcast %cst_11 : f32 to vector<1x64x1xf32>
      %c0_12 = arith.constant 0 : index
      %c0_13 = arith.constant 0 : index
      %c0_14 = arith.constant 0 : index
      %13 = vector.load %arg6[%c0_12, %c0_13, %c0_14] : memref<1x64x1xf32, #tpu.memory_space<vmem>>, vector<1x64x1xf32>
      tpu.vector_store %arg6[%c0_12, %c0_13, %c0_14], %12 {strides = array<i32>} : memref<1x64x1xf32, #tpu.memory_space<vmem>>, vector<1x64x1xf32>,
    } else {
    }
    %c0 = arith.constant 0 : index
    %c0_1 = arith.constant 0 : index
    %c0_2 = arith.constant 0 : index
    %3 = vector.load %arg6[%c0, %c0_1, %c0_2] : memref<1x64x1xf32, #tpu.memory_space<vmem>>, vector<1x64x1xf32>
    %c0_3 = arith.constant 0 : index
    %c0_4 = arith.constant 0 : index
    %c0_5 = arith.constant 0 : index
    %4 = vector.load %arg2[%c0_3, %c0_4, %c0_5] : memref<1x64x64xf32, #tpu.memory_space<vmem>>, vector<1x64x64xf32>
    %cst = arith.constant dense<0.000000e+00> : vector<1x64xf32>
    %5 = vector.multi_reduction <add>, %4, %cst [2] : vector<1x64x64xf32> to vector<1x64xf32>
    %6 = vector.shape_cast %5 : vector<1x64xf32> to vector<1x64x1xf32>
    %7 = arith.addf %3, %6 : vector<1x64x1xf32>
    %c0_6 = arith.constant 0 : index
    %c0_7 = arith.constant 0 : index
    %c0_8 = arith.constant 0 : index
    %8 = vector.load %arg6[%c0_6, %c0_7, %c0_8] : memref<1x64x1xf32, #tpu.memory_space<vmem>>, vector<1x64x1xf32>
    tpu.vector_store %arg6[%c0_6, %c0_7, %c0_8], %7 {strides = array<i32>} : memref<1x64x1xf32, #tpu.memory_space<vmem>>, vector<1x64x1xf32>,
    %c0_i32_9 = arith.constant 0 : i32
    %9 = arith.cmpi eq, %arg1, %c0_i32_9 : i32
    %10 = arith.extui %9 : i1 to i32
    %c0_i32_10 = arith.constant 0 : i32
    %11 = arith.cmpi ne, %10, %c0_i32_10 : i32
    scf.if %11 {
      %c0_11 = arith.constant 0 : index
      %c0_12 = arith.constant 0 : index
      %c0_13 = arith.constant 0 : index
      %12 = vector.load %arg6[%c0_11, %c0_12, %c0_13] : memref<1x64x1xf32, #tpu.memory_space<vmem>>, vector<1x64x1xf32>
      %13 = vector.shape_cast %12 : vector<1x64x1xf32> to vector<64x1xf32>
      %cst_14 = arith.constant 1.562500e-02 : f32
      %14 = vector.broadcast %cst_14 : f32 to vector<64x1xf32>
      %15 = arith.mulf %13, %14 : vector<64x1xf32>
      %c0_15 = arith.constant 0 : index
      %c0_16 = arith.constant 0 : index
      %16 = vector.load %arg3[%c0_15, %c0_16] : memref<4x64xf32, #tpu.memory_space<vmem>>, vector<4x64xf32>
      %cst_17 = arith.constant dense<0.000000e+00> : vector<4x1xf32>
      %17 = tpu.matmul %16, %15, %cst_17 {dimension_numbers = #tpu.dot_dimension_numbers<[1], [0], [0], [1], [0, 0, 1, 1], [], []>} : vector<4x64xf32>, vector<64x1xf32>, vector<4x1xf32> -> vector<4x1xf32>
      %cst_18 = arith.constant 0.000000e+00 : f32
      %18 = vector.broadcast %cst_18 : f32 to vector<4x1xf32>
      %19 = arith.maximumf %17, %18 : vector<4x1xf32>
      %c0_19 = arith.constant 0 : index
      %c0_20 = arith.constant 0 : index
      %20 = vector.load %arg4[%c0_19, %c0_20] : memref<64x4xf32, #tpu.memory_space<vmem>>, vector<64x4xf32>
      %cst_21 = arith.constant dense<0.000000e+00> : vector<64x1xf32>
      %21 = tpu.matmul %20, %19, %cst_21 {dimension_numbers = #tpu.dot_dimension_numbers<[1], [0], [0], [1], [0, 0, 1, 1], [], []>} : vector<64x4xf32>, vector<4x1xf32>, vector<64x1xf32> -> vector<64x1xf32>
      %22 = arith.negf %21 : vector<64x1xf32>
      %23 = math.exp %22 : vector<64x1xf32>
      %cst_22 = arith.constant 1.000000e+00 : f32
      %24 = vector.broadcast %cst_22 : f32 to vector<64x1xf32>
      %25 = arith.addf %24, %23 : vector<64x1xf32>
      %26 = arith.divf %24, %25 : vector<64x1xf32>
      %27 = vector.shape_cast %26 : vector<64x1xf32> to vector<1x64x1xf32>
      %c0_23 = arith.constant 0 : index
      %c0_24 = arith.constant 0 : index
      %c0_25 = arith.constant 0 : index
      %28 = vector.load %arg5[%c0_23, %c0_24, %c0_25] : memref<1x64x1xf32, #tpu.memory_space<vmem>>, vector<1x64x1xf32>
      tpu.vector_store %arg5[%c0_23, %c0_24, %c0_25], %27 {strides = array<i32>} : memref<1x64x1xf32, #tpu.memory_space<vmem>>, vector<1x64x1xf32>,
    } else {
    }
    return
  }
  func.func @transform_0(%arg0: i32, %arg1: i32) -> (i32, i32, i32) {
    %c0_i32 = arith.constant 0 : i32
    %c0_i32_0 = arith.constant 0 : i32
    return %arg0, %c0_i32, %arg1 : i32, i32, i32
  }
  func.func @transform_1(%arg0: i32, %arg1: i32) -> (i32, i32) {
    %c0_i32 = arith.constant 0 : i32
    %c0_i32_0 = arith.constant 0 : i32
    %c0_i32_1 = arith.constant 0 : i32
    return %c0_i32, %c0_i32_0 : i32, i32
  }
  func.func @transform_2(%arg0: i32, %arg1: i32) -> (i32, i32) {
    %c0_i32 = arith.constant 0 : i32
    %c0_i32_0 = arith.constant 0 : i32
    %c0_i32_1 = arith.constant 0 : i32
    return %c0_i32, %c0_i32_0 : i32, i32
  }
  func.func @transform_3(%arg0: i32, %arg1: i32) -> (i32, i32, i32) {
    %c0_i32 = arith.constant 0 : i32
    %c0_i32_0 = arith.constant 0 : i32
    %c0_i32_1 = arith.constant 0 : i32
    return %arg0, %c0_i32, %c0_i32_0 : i32, i32, i32
  }
}

</mosaic_0001>

<llo_original>
// kernel: tpu_custom_call.1
$region0: #{tpu_custom_call.1}
  #allocation0 [shape = 'u32[]', space=smem, size = 0x4, offset = 0x4, fixed_abs, tag = 'smem constant byte address 0x4 - core index']
  #allocation1 [shape = 'u32[144,128]{1,0:T(1,128)}', space=vmem, size = 0x12000, scoped, tag = 'internal scratch']
  #allocation2 [shape = 'f32[1,64,1]{2,1,0:T(8,128)}', space=vmem, size = 0x8000, scoped, tag = 'scratch operand']
  %s0 = inlined_call_operand.hbm [shape: f32[2,64,64], index: 0, kind: input, shape index: {}]
  %s1 = inlined_call_operand.vmem [shape: f32[4,64], index: 1, kind: input, shape index: {}]
  %s2 = inlined_call_operand.vmem [shape: f32[64,4], index: 2, kind: input, shape index: {}]
  %s3 = inlined_call_operand.vmem [shape: f32[2,64,1], index: 3, kind: output, shape index: {}]
  %s4 = sld [smem:[#allocation0]]
  $region57: #{tpu_custom_call.1} parent=0
    _
  %s6 = ssub.s32 1, %s4
  %s7 = scalar_select 0, %s6, %s4
  $region1: #{tpu_custom_call.1} parent=0
    #allocation3 [shape = 'u8[65536]{0}', space=vmem, size = 0x10000, scoped, tag = 'input window, operand 0']
    #allocation4 [shape = 's32[2]{0}', space=sflag, size = 0x8, scoped, tag = 'scoped memory for tpu_custom_call.1']
    %8 = vsyncpa [#allocation4], 0
    %s9 = scalar_lea.sflag [#allocation4], 1
    %10 = vsyncpa %s9, 0
    loop: start=0, step=1, limit=4
    $region2: #{tpu_custom_call.1} parent=1 // loop_pre_header
      _
    $region3: #{tpu_custom_call.1} parent=1 // loop_header
      %s12 = sphi 0, %s16
      %p13 = scmp.ge.s32.totalorder %s12, 4
      %s19 = sphi 0, %s31
      %s20 = sphi 0, %s27
      %s21 = sphi 0, %s19
      %s22 = sphi 0, %s20
      %s23 = sphi 0, %s21
      %s24 = sphi 0, %s22
      %s36 = sphi 0, %s38
      %s39 = sphi 0, %s36
      %s40 = sphi 0, %s39
      %s56 = sphi 0, %s40
      %s60 = sphi 0, %s60
      %s62 = sphi 0, %s60
      %s63 = sphi 0, %s62
      %s77 = sphi 0, %s63
      %s81 = sphi 0, %s81
      %s83 = sphi 0, %s81
      %s84 = sphi 0, %s83
      %s98 = sphi 0, %s84
      %s104 = sphi 0, %s106
      %s107 = sphi 0, %s104
      %s108 = sphi 0, %s107
      %s124 = sphi 0, %s108
    $region4: #{tpu_custom_call.1} parent=1 // loop_header_branch
      %15 = sbr.rel (%p13) target = $region8
    $region5: #{tpu_custom_call.1} parent=1 // loop_body
      %s17 = ssub.s32 %s12, 1
      %s18 = ssub.s32 %s12, 2
      %s25 = sadd.s32 1, %s20
      %p26 = scmp.ge.s32.totalorder %s25, 1
      %s27 = scalar_select %p26, 0, %s25
      %s28 = sadd.s32 1, %s19
      %s29 = scalar_select %p26, %s28, %s19
      %p30 = scmp.ge.s32.totalorder %s29, 2
      %s31 = scalar_select %p30, 0, %s29
      %s32 = ssub.s32 %s19, %s31
      %s33 = ssub.s32 %s20, %s27
      %s34 = sor.u32 %s32, %s33
      %p35 = scmp.eq.s32.totalorder %s34, 0
      %s37 = sadd.s32 %s36, 1
      %s38 = scalar_select %p35, %s36, %s37
      %p41 = pneg %p35
      %p42 = scmp.eq.s32.totalorder %s12, 1
      %p43 = por %p41, %p42
      %p44 = scmp.ne.s32.totalorder %s36, %s39
      %p45 = scmp.eq.s32.totalorder %s12, 0
      %p46 = por %p44, %p45
      %p47 = scmp.ne.s32.totalorder %s36, %s39
      %p48 = scmp.eq.s32.totalorder %s17, 1
      %p49 = por %p47, %p48
      %p50 = scmp.ne.s32.totalorder %s39, %s40
      %p51 = scmp.eq.s32.totalorder %s17, 0
      %p52 = por %p50, %p51
      %p53 = scmp.ne.s32.totalorder %s39, %s40
      %p54 = scmp.eq.s32.totalorder %s18, 1
      %p55 = por %p53, %p54
      %p57 = scmp.ne.s32.totalorder %s40, %s56
      %p58 = scmp.eq.s32.totalorder %s18, 0
      %p59 = por %p57, %p58
      %s61 = sadd.s32 %s60, 1
      %p64 = scmp.eq.s32.totalorder %s12, 1
      %p65 = scmp.ne.s32.totalorder %s60, %s62
      %p66 = scmp.eq.s32.totalorder %s12, 0
      %p67 = por %p65, %p66
      %p68 = scmp.ne.s32.totalorder %s60, %s62
      %p69 = scmp.eq.s32.totalorder %s17, 1
      %p70 = por %p68, %p69
      %p71 = scmp.ne.s32.totalorder %s62, %s63
      %p72 = scmp.eq.s32.totalorder %s17, 0
      %p73 = por %p71, %p72
      %p74 = scmp.ne.s32.totalorder %s62, %s63
      %p75 = scmp.eq.s32.totalorder %s18, 1
      %p76 = por %p74, %p75
      %p78 = scmp.ne.s32.totalorder %s63, %s77
      %p79 = scmp.eq.s32.totalorder %s18, 0
      %p80 = por %p78, %p79
      %s82 = sadd.s32 %s81, 1
      %p85 = scmp.eq.s32.totalorder %s12, 1
      %p86 = scmp.ne.s32.totalorder %s81, %s83
      %p87 = scmp.eq.s32.totalorder %s12, 0
      %p88 = por %p86, %p87
      %p89 = scmp.ne.s32.totalorder %s81, %s83
      %p90 = scmp.eq.s32.totalorder %s17, 1
      %p91 = por %p89, %p90
      %p92 = scmp.ne.s32.totalorder %s83, %s84
      %p93 = scmp.eq.s32.totalorder %s17, 0
      %p94 = por %p92, %p93
      %p95 = scmp.ne.s32.totalorder %s83, %s84
      %p96 = scmp.eq.s32.totalorder %s18, 1
      %p97 = por %p95, %p96
      %p99 = scmp.ne.s32.totalorder %s84, %s98
      %p100 = scmp.eq.s32.totalorder %s18, 0
      %p101 = por %p99, %p100
      %s102 = ssub.s32 %s19, %s31
      %p103 = scmp.eq.s32.totalorder %s102, 0
      %s105 = sadd.s32 %s104, 1
      %s106 = scalar_select %p103, %s104, %s105
      %p109 = pneg %p103
      %p110 = scmp.eq.s32.totalorder %s12, 1
      %p111 = por %p109, %p110
      %p112 = scmp.ne.s32.totalorder %s104, %s107
      %p113 = scmp.eq.s32.totalorder %s12, 0
      %p114 = por %p112, %p113
      %p115 = scmp.ne.s32.totalorder %s104, %s107
      %p116 = scmp.eq.s32.totalorder %s17, 1
      %p117 = por %p115, %p116
      %p118 = scmp.ne.s32.totalorder %s107, %s108
      %p119 = scmp.eq.s32.totalorder %s17, 0
      %p120 = por %p118, %p119
      %p121 = scmp.ne.s32.totalorder %s107, %s108
      %p122 = scmp.eq.s32.totalorder %s18, 1
      %p123 = por %p121, %p122
      %p125 = scmp.ne.s32.totalorder %s108, %s124
      %p126 = scmp.eq.s32.totalorder %s18, 0
      %p127 = por %p125, %p126
      %p128 = scmp.le.s32.totalorder 1, %s12
      %p129 = scmp.lt.s32.totalorder %s12, 3
      %p130 = pnand %p128, %p129
      %p131 = pneg %p130
      // Predicated region
      $region9: #{tpu_custom_call.1} parent=5 // pred_check
        _
      $region10: #{tpu_custom_call.1} parent=5 // pred_check_branch
        %133 = sbr.rel (%p130) target = $region12
      $region11: #{tpu_custom_call.1} parent=5 // pred_region
        %s134 = ssub.s32 %s12, 1
        // Predicated region
        $region13: #{tpu_custom_call.1} parent=11 // pred_check
          %p135 = pneg %p73
        $region14: #{tpu_custom_call.1} parent=11 // pred_check_branch
          %137 = sbr.rel (%p135) target = $region16
        $region15: #{tpu_custom_call.1} parent=11 // pred_region
          _
        $region16: #{tpu_custom_call.1} parent=11 // pred_fallthru
          _
        // Predicated region
        $region17: #{tpu_custom_call.1} parent=11 // pred_check
          %p138 = pneg %p94
        $region18: #{tpu_custom_call.1} parent=11 // pred_check_branch
          %140 = sbr.rel (%p138) target = $region20
        $region19: #{tpu_custom_call.1} parent=11 // pred_region
          _
        $region20: #{tpu_custom_call.1} parent=11 // pred_fallthru
          _
      $region12: #{tpu_custom_call.1} parent=5 // pred_fallthru
        _
      %p141 = scmp.lt.s32.totalorder %s12, 2
      // Predicated region
      $region21: #{tpu_custom_call.1} parent=5 // pred_check
        %p142 = pneg %p141
      $region22: #{tpu_custom_call.1} parent=5 // pred_check_branch
        %144 = sbr.rel (%p142) target = $region24
      $region23: #{tpu_custom_call.1} parent=5 // pred_region
        // Predicated region
        $region25: #{tpu_custom_call.1} parent=23 // pred_check
          %p145 = pneg %p46
        $region26: #{tpu_custom_call.1} parent=23 // pred_check_branch
          %147 = sbr.rel (%p145) target = $region28
        $region27: #{tpu_custom_call.1} parent=23 // pred_region
          %s148 = sand.u32 %s36, 1
          %s149 = scalar_lea.sflag [#allocation4], %s148
          %s150 = sand.u32 %s36, 1
          %s151 = smul.addr %s150, 64
          %s152 = scalar_lea.vmem [#allocation3], %s151
          %s154 = ssub.s32 1024, 1024
          %155 = vsyncadd %s149, %s154
          %s156 = smul.addr %s19, 8
          %s157 = sadd.s32 %s20, %s156
          %s158 = smul.addr %s157, 128
          %s159 = scalar_lea.hbm %s0, %s158
          %s160 = sshll.u32 %s152, 4
          %s161 = int_to_ptr.vmem [resolvable:$true] %s160
          %166 = dma.hbm_to_vmem [thread:$0]  %s159, 1024, %s161, %s149, 128, 128, 8
        $region28: #{tpu_custom_call.1} parent=23 // pred_fallthru
          _
      $region24: #{tpu_custom_call.1} parent=5 // pred_fallthru
        _
      %p167 = scmp.le.s32.totalorder 1, %s12
      %p168 = scmp.lt.s32.totalorder %s12, 3
      %p169 = pnand %p167, %p168
      %p170 = pneg %p169
      // Predicated region
      $region29: #{tpu_custom_call.1} parent=5 // pred_check
        _
      $region30: #{tpu_custom_call.1} parent=5 // pred_check_branch
        %172 = sbr.rel (%p169) target = $region32
      $region31: #{tpu_custom_call.1} parent=5 // pred_region
        %s173 = ssub.s32 %s12, 1
        %s174 = sand.u32 %s39, 1
        %s175 = scalar_lea.sflag [#allocation4], %s174
        %s176 = sand.u32 %s39, 1
        %s177 = smul.addr %s176, 64
        %s178 = scalar_lea.vmem [#allocation3], %s177
        // Predicated region
        $region33: #{tpu_custom_call.1} parent=31 // pred_check
          %p179 = pneg %p52
        $region34: #{tpu_custom_call.1} parent=31 // pred_check_branch
          %181 = sbr.rel (%p179) target = $region36
        $region35: #{tpu_custom_call.1} parent=31 // pred_region
          %182 = dma.done %s175, 1024
        $region36: #{tpu_custom_call.1} parent=31 // pred_fallthru
          _
        %s183 = sand.u32 %s39, 1
        %s184 = scalar_lea.sflag [#allocation4], %s183
        %s185 = sand.u32 %s39, 1
        %s186 = smul.addr %s185, 64
        %s187 = scalar_lea.vmem [#allocation3], %s186
        %p188 = pneg %p52
        %p189 = pneg %p49
        %p190 = pneg %p73
        %p191 = pneg %p70
        %p192 = pneg %p94
        %p193 = pneg %p91
        %p194 = pneg %p120
        %p195 = pneg %p117
        %p196 = scmp.lt.s32.totalorder %s21, 1
        %s197 = scalar_select %p196, %s21, 1
        %s198 = smul.addr %s197, 8
        %s199 = smul.addr %s198, 8
        %s200 = scalar_lea.vmem %s3, %s199
        %p201 = scmp.lt.s32.totalorder %s21, 1
        %s202 = scalar_select %p201, %s21, 1
        %s203 = smul.addr %s202, 8
        %s204 = smul.addr %s203, 8
        %s205 = scalar_lea.vmem %s3, %s204
        %p206 = scmp.eq.s32.totalorder %s22, 0
        // Predicated region
        $region37: #{tpu_custom_call.1} parent=31 // pred_check
          %p207 = pneg %p206
        $region38: #{tpu_custom_call.1} parent=31 // pred_check_branch
          %209 = sbr.rel (%p207) target = $region40
        $region39: #{tpu_custom_call.1} parent=31 // pred_region
          %vm210 = vcmask 7168
          %211 = vst.msk [vmem:[#allocation2] sm:$0xff] %vm210, 0.0
          %212 = vst.msk [vmem:[#allocation2 + $0x8] sm:$0xff] %vm210, 0.0
          %213 = vst.msk [vmem:[#allocation2 + $0x10] sm:$0xff] %vm210, 0.0
          %214 = vst.msk [vmem:[#allocation2 + $0x18] sm:$0xff] %vm210, 0.0
          %215 = vst.msk [vmem:[#allocation2 + $0x20] sm:$0xff] %vm210, 0.0
          %216 = vst.msk [vmem:[#allocation2 + $0x28] sm:$0xff] %vm210, 0.0
          %217 = vst.msk [vmem:[#allocation2 + $0x30] sm:$0xff] %vm210, 0.0
          %218 = vst.msk [vmem:[#allocation2 + $0x38] sm:$0xff] %vm210, 0.0
        $region40: #{tpu_custom_call.1} parent=31 // pred_fallthru
          _
        %v219 = vld [vmem:[#allocation2] sm:$0xff]
        %v220 = vld [vmem:[#allocation2 + $0x8] sm:$0xff]
        %v221 = vld [vmem:[#allocation2 + $0x10] sm:$0xff]
        %v222 = vld [vmem:[#allocation2 + $0x18] sm:$0xff]
        %v223 = vld [vmem:[#allocation2 + $0x20] sm:$0xff]
        %v224 = vld [vmem:[#allocation2 + $0x28] sm:$0xff]
        %v225 = vld [vmem:[#allocation2 + $0x30] sm:$0xff]
        %v226 = vld [vmem:[#allocation2 + $0x38] sm:$0xff]
        %v227 = vld [vmem:[%s178] sm:$0xff]
        %v228 = vld [vmem:[%s178 + $0x8] sm:$0xff]
        %v229 = vld [vmem:[%s178 + $0x10] sm:$0xff]
        %v230 = vld [vmem:[%s178 + $0x18] sm:$0xff]
        %v231 = vld [vmem:[%s178 + $0x20] sm:$0xff]
        %v232 = vld [vmem:[%s178 + $0x28] sm:$0xff]
        %v233 = vld [vmem:[%s178 + $0x30] sm:$0xff]
        %v234 = vld [vmem:[%s178 + $0x38] sm:$0xff]
        %vm235 = vcmask 523264
        %v236 = vsel %vm235, %v227, 0.0
        %237 = vadd.xlane.f32.xlu0 %v236
        %v238 = vpop.xlane.xlu0 %237
        %v239 = vsel %vm235, %v228, 0.0
        %240 = vadd.xlane.f32.xlu0 %v239
        %v241 = vpop.xlane.xlu0 %240
        %v242 = vsel %vm235, %v229, 0.0
        %243 = vadd.xlane.f32.xlu0 %v242
        %v244 = vpop.xlane.xlu0 %243
        %v245 = vsel %vm235, %v230, 0.0
        %246 = vadd.xlane.f32.xlu0 %v245
        %v247 = vpop.xlane.xlu0 %246
        %v248 = vsel %vm235, %v231, 0.0
        %249 = vadd.xlane.f32.xlu0 %v248
        %v250 = vpop.xlane.xlu0 %249
        %v251 = vsel %vm235, %v232, 0.0
        %252 = vadd.xlane.f32.xlu0 %v251
        %v253 = vpop.xlane.xlu0 %252
        %v254 = vsel %vm235, %v233, 0.0
        %255 = vadd.xlane.f32.xlu0 %v254
        %v256 = vpop.xlane.xlu0 %255
        %v257 = vsel %vm235, %v234, 0.0
        %258 = vadd.xlane.f32.xlu0 %v257
        %v259 = vpop.xlane.xlu0 %258
        %v260 = vadd.f32 %v219, %v238
        %v261 = vadd.f32 %v220, %v241
        %v262 = vadd.f32 %v221, %v244
        %v263 = vadd.f32 %v222, %v247
        %v264 = vadd.f32 %v223, %v250
        %v265 = vadd.f32 %v224, %v253
        %v266 = vadd.f32 %v225, %v256
        %v267 = vadd.f32 %v226, %v259
        %vm268 = vcmask 7168
        %269 = vst.msk [vmem:[#allocation2] sm:$0xff] %vm268, %v260
        %270 = vst.msk [vmem:[#allocation2 + $0x8] sm:$0xff] %vm268, %v261
        %271 = vst.msk [vmem:[#allocation2 + $0x10] sm:$0xff] %vm268, %v262
        %272 = vst.msk [vmem:[#allocation2 + $0x18] sm:$0xff] %vm268, %v263
        %273 = vst.msk [vmem:[#allocation2 + $0x20] sm:$0xff] %vm268, %v264
        %274 = vst.msk [vmem:[#allocation2 + $0x28] sm:$0xff] %vm268, %v265
        %275 = vst.msk [vmem:[#allocation2 + $0x30] sm:$0xff] %vm268, %v266
        %276 = vst.msk [vmem:[#allocation2 + $0x38] sm:$0xff] %vm268, %v267
        // Predicated region
        $region41: #{tpu_custom_call.1} parent=31 // pred_check
          %p277 = pneg %p206
        $region42: #{tpu_custom_call.1} parent=31 // pred_check_branch
          %279 = sbr.rel (%p277) target = $region44
        $region43: #{tpu_custom_call.1} parent=31 // pred_region
          %v280 = vld [vmem:[#allocation2] sm:$0xff]
          %v281 = vld [vmem:[#allocation2 + $0x8] sm:$0xff]
          %v282 = vld [vmem:[#allocation2 + $0x10] sm:$0xff]
          %v283 = vld [vmem:[#allocation2 + $0x18] sm:$0xff]
          %v284 = vld [vmem:[#allocation2 + $0x20] sm:$0xff]
          %v285 = vld [vmem:[#allocation2 + $0x28] sm:$0xff]
          %v286 = vld [vmem:[#allocation2 + $0x30] sm:$0xff]
          %v287 = vld [vmem:[#allocation2 + $0x38] sm:$0xff]
          %v288 = vmul.f32 %v280, 0.015625
          %v289 = vmul.f32 %v281, 0.015625
          %v290 = vmul.f32 %v282, 0.015625
          %v291 = vmul.f32 %v283, 0.015625
          %v292 = vmul.f32 %v284, 0.015625
          %v293 = vmul.f32 %v285, 0.015625
          %v294 = vmul.f32 %v286, 0.015625
          %v295 = vmul.f32 %v287, 0.015625
          %v296 = vld [vmem:[%s1] sm:$0xf]
          %v298 = vsel %vm235, %v296, 0
          %300 = vmatprep.subr.mxu0 0.0
          %301 = vmatpush1.msra.mxu0 %v288
          %302 = vmatprep.subr.mxu0 0.0
          %303 = vmatpush1.msra.mxu0 %v289
          %304 = vmatprep.subr.mxu0 0.0
          %305 = vmatpush1.msra.mxu0 %v290
          %306 = vmatprep.subr.mxu0 0.0
          %307 = vmatpush1.msra.mxu0 %v291
          %308 = vmatprep.subr.mxu0 0.0
          %309 = vmatpush1.msra.mxu0 %v292
          %310 = vmatprep.subr.mxu0 0.0
          %311 = vmatpush1.msra.mxu0 %v293
          %312 = vmatprep.subr.mxu0 0.0
          %313 = vmatpush1.msra.mxu0 %v294
          %314 = vmatprep.subr.mxu0 0.0
          %315 = vmatpush1.msra.mxu0 %v295
          %316 = vmatprep.subr.mxu0 0.0
          %317 = vmatpush1.msra.mxu0 0.0
          %318 = vmatprep.subr.mxu0 0.0
          %319 = vmatpush1.msra.mxu0 0.0
          %320 = vmatprep.subr.mxu0 0.0
          %321 = vmatpush1.msra.mxu0 0.0
          %322 = vmatprep.subr.mxu0 0.0
          %323 = vmatpush1.msra.mxu0 0.0
          %324 = vmatprep.subr.mxu0 0.0
          %325 = vmatpush1.msra.mxu0 0.0
          %326 = vmatprep.subr.mxu0 0.0
          %327 = vmatpush1.msra.mxu0 0.0
          %328 = vmatprep.subr.mxu0 0.0
          %329 = vmatpush1.msra.mxu0 0.0
          %330 = vmatprep.subr.mxu0 0.0
          %331 = vmatpush1.msra.mxu0 0.0
          %332 = vmatprep.subr.mxu0 0.0
          %333 = vmatpush1.msra.mxu0 0.0
          %334 = vmatprep.subr.mxu0 0.0
          %335 = vmatpush1.msra.mxu0 0.0
          %336 = vmatprep.subr.mxu0 0.0
          %337 = vmatpush1.msra.mxu0 0.0
          %338 = vmatprep.subr.mxu0 0.0
          %339 = vmatpush1.msra.mxu0 0.0
          %340 = vmatprep.subr.mxu0 0.0
          %341 = vmatpush1.msra.mxu0 0.0
          %342 = vmatprep.subr.mxu0 0.0
          %343 = vmatpush1.msra.mxu0 0.0
          %344 = vmatprep.subr.mxu0 0.0
          %345 = vmatpush1.msra.mxu0 0.0
          %346 = vmatprep.subr.mxu0 0.0
          %347 = vmatpush1.msra.mxu0 0.0
          %348 = vmatprep.subr.mxu0 0.0
          %349 = vmatpush1.msra.mxu0 0.0
          %350 = vmatprep.subr.mxu0 0.0
          %351 = vmatpush1.msra.mxu0 0.0
          %352 = vmatprep.subr.mxu0 0.0
          %353 = vmatpush1.msra.mxu0 0.0
          %354 = vmatprep.subr.mxu0 0.0
          %355 = vmatpush1.msra.mxu0 0.0
          %356 = vmatprep.subr.mxu0 0.0
          %357 = vmatpush1.msra.mxu0 0.0
          %358 = vmatprep.subr.mxu0 0.0
          %359 = vmatpush1.msra.mxu0 0.0
          %360 = vmatprep.subr.mxu0 0.0
          %361 = vmatpush1.msra.mxu0 0.0
          %362 = vmatprep.subr.mxu0 0.0
          %363 = vmatpush1.msra.mxu0 0.0
          %364 = vmatprep.mubr.f32.mxu0 0.0
          %365 = vmatmul.mubr.f32.gmra.mrb[0].mxu0 %v298
          %v366 = vpop.f32.mrb[0].mxu0
          %v367 = vadd.f32 0.0, %v366
          %v368 = vpop.f32.mrb[0].mxu0
          %369 = vdwg.mxu0
          %v370 = vmax.f32 %v367, 0.0
          %v371 = vld [vmem:[%s2] sm:$0xff]
          %v372 = vld [vmem:[%s2 + $0x8] sm:$0xff]
          %v373 = vld [vmem:[%s2 + $0x10] sm:$0xff]
          %v374 = vld [vmem:[%s2 + $0x18] sm:$0xff]
          %v375 = vld [vmem:[%s2 + $0x20] sm:$0xff]
          %v376 = vld [vmem:[%s2 + $0x28] sm:$0xff]
          %v377 = vld [vmem:[%s2 + $0x30] sm:$0xff]
          %v378 = vld [vmem:[%s2 + $0x38] sm:$0xff]
          %vm379 = vcmask 31744
          %v381 = vsel %vm379, %v371, 0
          %v384 = vsel %vm379, %v372, 0
          %v387 = vsel %vm379, %v373, 0
          %v390 = vsel %vm379, %v374, 0
          %v393 = vsel %vm379, %v375, 0
          %v396 = vsel %vm379, %v376, 0
          %v399 = vsel %vm379, %v377, 0
          %v402 = vsel %vm379, %v378, 0
          %vm404 = vcmask 1043456
          %v406 = vsel %vm404, %v370, 0
          %408 = vmatprep.subr.mxu0 0.0
          %409 = vmatpush1.msra.mxu0 %v406
          %410 = vmatprep.subr.mxu0 0.0
          %411 = vmatpush1.msra.mxu0 0.0
          %412 = vmatprep.subr.mxu0 0.0
          %413 = vmatpush1.msra.mxu0 0.0
          %414 = vmatprep.subr.mxu0 0.0
          %415 = vmatpush1.msra.mxu0 0.0
          %416 = vmatprep.subr.mxu0 0.0
          %417 = vmatpush1.msra.mxu0 0.0
          %418 = vmatprep.subr.mxu0 0.0
          %419 = vmatpush1.msra.mxu0 0.0
          %420 = vmatprep.subr.mxu0 0.0
          %421 = vmatpush1.msra.mxu0 0.0
          %422 = vmatprep.subr.mxu0 0.0
          %423 = vmatpush1.msra.mxu0 0.0
          %424 = vmatprep.subr.mxu0 0.0
          %425 = vmatpush1.msra.mxu0 0.0
          %426 = vmatprep.subr.mxu0 0.0
          %427 = vmatpush1.msra.mxu0 0.0
          %428 = vmatprep.subr.mxu0 0.0
          %429 = vmatpush1.msra.mxu0 0.0
          %430 = vmatprep.subr.mxu0 0.0
          %431 = vmatpush1.msra.mxu0 0.0
          %432 = vmatprep.subr.mxu0 0.0
          %433 = vmatpush1.msra.mxu0 0.0
          %434 = vmatprep.subr.mxu0 0.0
          %435 = vmatpush1.msra.mxu0 0.0
          %436 = vmatprep.subr.mxu0 0.0
          %437 = vmatpush1.msra.mxu0 0.0
          %438 = vmatprep.subr.mxu0 0.0
          %439 = vmatpush1.msra.mxu0 0.0
          %440 = vmatprep.subr.mxu0 0.0
          %441 = vmatpush1.msra.mxu0 0.0
          %442 = vmatprep.subr.mxu0 0.0
          %443 = vmatpush1.msra.mxu0 0.0
          %444 = vmatprep.subr.mxu0 0.0
          %445 = vmatpush1.msra.mxu0 0.0
          %446 = vmatprep.subr.mxu0 0.0
          %447 = vmatpush1.msra.mxu0 0.0
          %448 = vmatprep.subr.mxu0 0.0
          %449 = vmatpush1.msra.mxu0 0.0
          %450 = vmatprep.subr.mxu0 0.0
          %451 = vmatpush1.msra.mxu0 0.0
          %452 = vmatprep.subr.mxu0 0.0
          %453 = vmatpush1.msra.mxu0 0.0
          %454 = vmatprep.subr.mxu0 0.0
          %455 = vmatpush1.msra.mxu0 0.0
          %456 = vmatprep.subr.mxu0 0.0
          %457 = vmatpush1.msra.mxu0 0.0
          %458 = vmatprep.subr.mxu0 0.0
          %459 = vmatpush1.msra.mxu0 0.0
          %460 = vmatprep.subr.mxu0 0.0
          %461 = vmatpush1.msra.mxu0 0.0
          %462 = vmatprep.subr.mxu0 0.0
          %463 = vmatpush1.msra.mxu0 0.0
          %464 = vmatprep.subr.mxu0 0.0
          %465 = vmatpush1.msra.mxu0 0.0
          %466 = vmatprep.subr.mxu0 0.0
          %467 = vmatpush1.msra.mxu0 0.0
          %468 = vmatprep.subr.mxu0 0.0
          %469 = vmatpush1.msra.mxu0 0.0
          %470 = vmatprep.subr.mxu0 0.0
          %471 = vmatpush1.msra.mxu0 0.0
          %472 = vmatprep.mubr.f32.mxu0 0.0
          %473 = vmatmul.mubr.f32.gmra.mrb[0].mxu0 %v381
          %v474 = vpop.f32.mrb[0].mxu0
          %v475 = vadd.f32 0.0, %v474
          %v476 = vpop.f32.mrb[0].mxu0
          %477 = vmatprep.mubr.f32.mxu0 0.0
          %478 = vmatmul.mubr.f32.gmra.mrb[0].mxu0 %v384
          %v479 = vpop.f32.mrb[0].mxu0
          %v480 = vadd.f32 0.0, %v479
          %v481 = vpop.f32.mrb[0].mxu0
          %482 = vmatprep.mubr.f32.mxu0 0.0
          %483 = vmatmul.mubr.f32.gmra.mrb[0].mxu0 %v387
          %v484 = vpop.f32.mrb[0].mxu0
          %v485 = vadd.f32 0.0, %v484
          %v486 = vpop.f32.mrb[0].mxu0
          %487 = vmatprep.mubr.f32.mxu0 0.0
          %488 = vmatmul.mubr.f32.gmra.mrb[0].mxu0 %v390
          %v489 = vpop.f32.mrb[0].mxu0
          %v490 = vadd.f32 0.0, %v489
          %v491 = vpop.f32.mrb[0].mxu0
          %492 = vmatprep.mubr.f32.mxu0 0.0
          %493 = vmatmul.mubr.f32.gmra.mrb[0].mxu0 %v393
          %v494 = vpop.f32.mrb[0].mxu0
          %v495 = vadd.f32 0.0, %v494
          %v496 = vpop.f32.mrb[0].mxu0
          %497 = vmatprep.mubr.f32.mxu0 0.0
          %498 = vmatmul.mubr.f32.gmra.mrb[0].mxu0 %v396
          %v499 = vpop.f32.mrb[0].mxu0
          %v500 = vadd.f32 0.0, %v499
          %v501 = vpop.f32.mrb[0].mxu0
          %502 = vmatprep.mubr.f32.mxu0 0.0
          %503 = vmatmul.mubr.f32.gmra.mrb[0].mxu0 %v399
          %v504 = vpop.f32.mrb[0].mxu0
          %v505 = vadd.f32 0.0, %v504
          %v506 = vpop.f32.mrb[0].mxu0
          %507 = vmatprep.mubr.f32.mxu0 0.0
          %508 = vmatmul.mubr.f32.gmra.mrb[0].mxu0 %v402
          %v509 = vpop.f32.mrb[0].mxu0
          %v510 = vadd.f32 0.0, %v509
          %v511 = vpop.f32.mrb[0].mxu0
          %512 = vdwg.mxu0
          %v513 = vxor.u32 %v475, 2147483648
          %v514 = vxor.u32 %v480, 2147483648
          %v515 = vxor.u32 %v485, 2147483648
          %v516 = vxor.u32 %v490, 2147483648
          %v517 = vxor.u32 %v495, 2147483648
          %v518 = vxor.u32 %v500, 2147483648
          %v519 = vxor.u32 %v505, 2147483648
          %v520 = vxor.u32 %v510, 2147483648
          %v521 = vmul.f32 %v513, 1.442695
          %v522 = vpow.pop %v521
          %v523 = vmul.f32 %v514, 1.442695
          %v524 = vpow.pop %v523
          %v525 = vmul.f32 %v515, 1.442695
          %v526 = vpow.pop %v525
          %v527 = vmul.f32 %v516, 1.442695
          %v528 = vpow.pop %v527
          %v529 = vmul.f32 %v517, 1.442695
          %v530 = vpow.pop %v529
          %v531 = vmul.f32 %v518, 1.442695
          %v532 = vpow.pop %v531
          %v533 = vmul.f32 %v519, 1.442695
          %v534 = vpow.pop %v533
          %v535 = vmul.f32 %v520, 1.442695
          %v536 = vpow.pop %v535
          %v537 = vadd.f32 %v522, 1.0
          %v538 = vadd.f32 %v524, 1.0
          %v539 = vadd.f32 %v526, 1.0
          %v540 = vadd.f32 %v528, 1.0
          %v541 = vadd.f32 %v530, 1.0
          %v542 = vadd.f32 %v532, 1.0
          %v543 = vadd.f32 %v534, 1.0
          %v544 = vadd.f32 %v536, 1.0
          %v545 = vrcp.pop %v537
          %v546 = vmul.f32 1.0, %v545
          %v547 = vrcp.pop %v538
          %v548 = vmul.f32 1.0, %v547
          %v549 = vrcp.pop %v539
          %v550 = vmul.f32 1.0, %v549
          %v551 = vrcp.pop %v540
          %v552 = vmul.f32 1.0, %v551
          %v553 = vrcp.pop %v541
          %v554 = vmul.f32 1.0, %v553
          %v555 = vrcp.pop %v542
          %v556 = vmul.f32 1.0, %v555
          %v557 = vrcp.pop %v543
          %v558 = vmul.f32 1.0, %v557
          %v559 = vrcp.pop %v544
          %v560 = vmul.f32 1.0, %v559
          %561 = vst.msk [vmem:[%s205] sm:$0xff] %vm268, %v546
          %562 = vst.msk [vmem:[%s205 + $0x8] sm:$0xff] %vm268, %v548
          %563 = vst.msk [vmem:[%s205 + $0x10] sm:$0xff] %vm268, %v550
          %564 = vst.msk [vmem:[%s205 + $0x18] sm:$0xff] %vm268, %v552
          %565 = vst.msk [vmem:[%s205 + $0x20] sm:$0xff] %vm268, %v554
          %566 = vst.msk [vmem:[%s205 + $0x28] sm:$0xff] %vm268, %v556
          %567 = vst.msk [vmem:[%s205 + $0x30] sm:$0xff] %vm268, %v558
          %568 = vst.msk [vmem:[%s205 + $0x38] sm:$0xff] %vm268, %v560
        $region44: #{tpu_custom_call.1} parent=31 // pred_fallthru
          _
        %p569 = scmp.lt.s32.totalorder %s21, 1
        %s570 = scalar_select %p569, %s21, 1
        %s571 = smul.addr %s570, 8
        %s572 = smul.addr %s571, 8
        %s573 = scalar_lea.vmem %s3, %s572
        // Predicated region
        $region45: #{tpu_custom_call.1} parent=31 // pred_check
          %p574 = pneg %p117
        $region46: #{tpu_custom_call.1} parent=31 // pred_check_branch
          %576 = sbr.rel (%p574) target = $region48
        $region47: #{tpu_custom_call.1} parent=31 // pred_region
          _
        $region48: #{tpu_custom_call.1} parent=31 // pred_fallthru
          _
      $region32: #{tpu_custom_call.1} parent=5 // pred_fallthru
        _
      %p577 = scmp.le.s32.totalorder 2, %s12
      // Predicated region
      $region49: #{tpu_custom_call.1} parent=5 // pred_check
        %p578 = pneg %p577
      $region50: #{tpu_custom_call.1} parent=5 // pred_check_branch
        %580 = sbr.rel (%p578) target = $region52
      $region51: #{tpu_custom_call.1} parent=5 // pred_region
        %s581 = ssub.s32 %s12, 2
        // Predicated region
        $region53: #{tpu_custom_call.1} parent=51 // pred_check
          %p582 = pneg %p123
        $region54: #{tpu_custom_call.1} parent=51 // pred_check_branch
          %584 = sbr.rel (%p582) target = $region56
        $region55: #{tpu_custom_call.1} parent=51 // pred_region
          %p585 = scmp.lt.s32.totalorder %s23, 1
          %s586 = scalar_select %p585, %s23, 1
          %s587 = smul.addr %s586, 8
          %s588 = smul.addr %s587, 8
          %s589 = scalar_lea.vmem %s3, %s588
        $region56: #{tpu_custom_call.1} parent=51 // pred_fallthru
          _
      $region52: #{tpu_custom_call.1} parent=5 // pred_fallthru
        _
    $region6: #{tpu_custom_call.1} parent=1 // loop_footer
      %s16 = sadd.s32 1, %s12
    $region7: #{tpu_custom_call.1} parent=1 // loop_footer_branch
      %11 = sbr.rel target = $region3
    $region8: #{tpu_custom_call.1} parent=1 // loop_exit
      _
    %590 = vsyncpa [#allocation4], 1
    %s591 = scalar_lea.sflag [#allocation4], 1
    %592 = vsyncpa %s591, 1

</llo_original>
